<compile_context>
chip_gen: v6e
topology: v6e:2x2x1
jax: 0.10.0
libtpu: 0.0.40
codegen_flags: <defaults>
</compile_context>

<pallas_src>
import numpy as np
import jax
import jax.numpy as jnp
from jax import lax
from jax.experimental import pallas as pl
from jax.experimental.pallas import tpu as pltpu

_NUM_ITER = 10
_EPS = 1e-10


def _make_cg_kernel(height, num_iter=_NUM_ITER, eps=_EPS):
    f32 = jnp.float32
    H = int(height)

    def kernel(lam_ref, rhs_ref, mask2_ref, fh_ref, gh_ref,
               cwtr_ref, cwti_ref, dwtr_ref, dwti_ref, out_ref):
        lam = lam_ref[0]
        mask2 = mask2_ref[...]               # (2H, W): mask stacked twice along rows
        FH = fh_ref[...]                     # (2H, 2H) block-complex centered DFT (H)
        GH = gh_ref[...]                     # (2H, 2H) block-complex centered IDFT (H)
        CwTR, CwTI = cwtr_ref[...], cwti_ref[...]   # (W, W) C_W^T real / imag
        DwTR, DwTI = dwtr_ref[...], dwti_ref[...]   # (W, W) D_W^T real / imag

        def crmul(z, Nr, Ni):
            # (zr + i zi) @ (Nr + i Ni) on a row-stacked z = [zr; zi] (2H, W).
            p = jnp.dot(z, Nr, preferred_element_type=f32)   # [zr Nr; zi Nr]
            q = jnp.dot(z, Ni, preferred_element_type=f32)   # [zr Ni; zi Ni]
            yr = p[:H, :] - q[H:, :]                         # zr Nr - zi Ni
            yi = q[:H, :] + p[H:, :]                         # zr Ni + zi Nr
            return jnp.concatenate([yr, yi], axis=0)

        def ata(z):
            # AtA(p) = ifft2c(mask * fft2c(p)) on the row-stacked representation.
            y = jnp.dot(FH, z, preferred_element_type=f32)   # fft along H (1 matmul)
            y = crmul(y, CwTR, CwTI)                         # fft along W (2 matmuls)
            y = y * mask2                                    # k-space mask (real)
            y = jnp.dot(GH, y, preferred_element_type=f32)   # ifft along H (1 matmul)
            y = crmul(y, DwTR, DwTI)                         # ifft along W (2 matmuls)
            return y

        r0 = rhs_ref[0]                      # (2H, W) = [real; imag]
        x0 = jnp.zeros_like(r0)
        rtr0 = jnp.sum(r0 * r0)              # == sum(|rhs|^2)

        def cond(carry):
            i, done = carry[0], carry[1]
            return jnp.logical_and(i < num_iter, done == 0)

        def body(carry):
            i, _, x, r, p, rtr = carry
            ap = ata(p) + lam * p
            pap = jnp.sum(p * ap)            # == Re{<p, Ap>}
            alpha = rtr / pap
            x = x + alpha * p
            r = r - alpha * ap
            rtr_new = jnp.sum(r * r)
            # torch `break` happens before p / rTr are updated; if converged the loop
            # exits and p / rTr are dead, so unconditional updates keep exact semantics.
            beta = rtr_new / rtr
            p = r + beta * p
            done = (rtr_new < eps).astype(jnp.int32)
            return (i + 1, done, x, r, p, rtr_new)

        carry0 = (jnp.int32(0), jnp.int32(0), x0, r0, r0, rtr0)
        final = lax.while_loop(cond, body, carry0)
        out_ref[0] = final[2]

    return kernel


def _centered_dft_matrix(n, inverse=False):
    """Matrix M s.t. M @ v == fftshift((i)fft(ifftshift(v), norm='ortho'))."""
    eye = np.eye(n)
    x = np.fft.ifftshift(eye, axes=0)
    y = np.fft.ifft(x, axis=0, norm="ortho") if inverse else \
        np.fft.fft(x, axis=0, norm="ortho")
    return np.fft.fftshift(y, axes=0)


def _block_complex(m):
    """[[Re, -Im], [Im, Re]] — one real matmul applies the complex matrix on the left
    to a row-stacked [real; imag] operand."""
    return np.block([[m.real, -m.imag], [m.imag, m.real]])


def conjugated_grad(rhs, mask, lam):
    """rhs: (B, 2, H, W) float32 (NCHW real/imag channels); mask: (H, W); lam: float.
    Returns complex64 (B, H, W), matching the torch module's output."""
    batch, chans, height, width = rhs.shape
    assert chans == 2
    rhs = jnp.asarray(rhs, jnp.float32)
    mask = jnp.asarray(mask, jnp.float32)

    # (B, 2, H, W) -> (B, 2H, W): real rows on top, imag rows below (free reshape).
    rhs_stk = rhs.reshape(batch, 2 * height, width)
    mask2 = jnp.concatenate([mask, mask], axis=0)          # (2H, W)

    ch = _centered_dft_matrix(height, inverse=False)
    dh = _centered_dft_matrix(height, inverse=True)
    cwt = _centered_dft_matrix(width, inverse=False).T
    dwt = _centered_dft_matrix(width, inverse=True).T
    to32 = lambda a: jnp.asarray(np.ascontiguousarray(a), jnp.float32)

    def const2d(rows, cols):
        # Whole-array block, constant index -> fetched once, resident across the grid.
        return pl.BlockSpec((rows, cols), lambda b: (0, 0))

    smem = pl.BlockSpec(memory_space=pltpu.MemorySpace.SMEM)
    rhs_spec = pl.BlockSpec((1, 2 * height, width), lambda b: (b, 0, 0))
    out_spec = pl.BlockSpec((1, 2 * height, width), lambda b: (b, 0, 0))

    # Advisory cost: per AtA = 2 block matmuls (2H,2H,W) + 4 matmuls (2H,W,W).
    flops = int(_NUM_ITER * batch * 16 * height * width * (height + width))
    bytes_accessed = int(4 * (2 * batch * 2 * height * width            # rhs + out
                              + 2 * height * width                      # mask2
                              + 2 * (2 * height) ** 2 + 4 * width * width))  # tables

    # VMEM footprint: resident DFT tables + mask2, double-buffered rhs/out blocks,
    # and the CG loop-live stacked planes; 3x margin, clamped to a safe window.
    plane = 2 * height * width
    footprint = 4 * (2 * (2 * height) ** 2 + 4 * width * width + plane   # tables+mask2
                     + 2 * 2 * plane                                     # rhs/out dbl-buf
                     + 12 * plane)                                       # loop-live planes
    vmem_limit = int(min(48 * 1024 * 1024, max(16 * 1024 * 1024, 3 * footprint)))

    out = pl.pallas_call(
        _make_cg_kernel(height),
        out_shape=jax.ShapeDtypeStruct((batch, 2 * height, width), jnp.float32),
        grid=(batch,),
        in_specs=[smem, rhs_spec,
                  const2d(2 * height, width),                 # mask2
                  const2d(2 * height, 2 * height),            # FH (block-complex fft_H)
                  const2d(2 * height, 2 * height),            # GH (block-complex ifft_H)
                  const2d(width, width), const2d(width, width),   # CwT (re, im)
                  const2d(width, width), const2d(width, width)],  # DwT (re, im)
        out_specs=out_spec,
        compiler_params=pltpu.CompilerParams(
            dimension_semantics=("parallel",),      # shard batch over TCs (megacore)
            vmem_limit_bytes=vmem_limit),
        cost_estimate=pl.CostEstimate(flops=flops, transcendentals=0,
                                      bytes_accessed=bytes_accessed),
    )(jnp.asarray([lam], jnp.float32), rhs_stk, mask2,
      to32(_block_complex(ch)), to32(_block_complex(dh)),
      to32(cwt.real), to32(cwt.imag), to32(dwt.real), to32(dwt.imag))

    # TODO(synk): with the batch grid the 1e-10 early-exit test is per image rather than
    # max-over-batch as in torch; the residual at break is < 1e-5 so x is unaffected.
    return lax.complex(out[:, :height], out[:, height:])


def _reference(rhs, mask, lam, num_iter=_NUM_ITER, eps=_EPS):
    """Pure-JAX replica of the torch forward (uses jnp.fft) for validation."""
    r = (rhs[:, 0] + 1j * rhs[:, 1]).astype(jnp.complex64)
    mask = jnp.asarray(mask, jnp.float32)

    def fft2c(x):
        return jnp.fft.fftshift(jnp.fft.fft2(jnp.fft.ifftshift(x, axes=(-2, -1)),
                                             axes=(-2, -1), norm="ortho"),
                                axes=(-2, -1))

    def ifft2c(x):
        return jnp.fft.fftshift(jnp.fft.ifft2(jnp.fft.ifftshift(x, axes=(-2, -1)),
                                              axes=(-2, -1), norm="ortho"),
                                axes=(-2, -1))

    def ata(d):
        return ifft2c(fft2c(d) * mask)

    x = jnp.zeros_like(r)
    p = r
    rtr = jnp.sum(jnp.conj(r) * r, axis=(-2, -1)).real
    for _ in range(num_iter):
        ap = ata(p) + lam * p
        alpha = rtr / jnp.sum(jnp.conj(p) * ap, axis=(-2, -1)).real
        x = x + alpha[:, None, None] * p
        r = r - alpha[:, None, None] * ap
        rtr_new = jnp.sum(jnp.conj(r) * r, axis=(-2, -1)).real
        if float(rtr_new.max()) < eps:
            break
        beta = rtr_new / rtr
        rtr = rtr_new
        p = r + beta[:, None, None] * p
    return x


if __name__ == "__main__":
    key = jax.random.PRNGKey(0)
    k1, k2 = jax.random.split(key)
    B, H, W = 2, 16, 16
    rhs = jax.random.normal(k1, (B, 2, H, W), dtype=jnp.float32)       # NCHW (re, im)
    mask = (jax.random.uniform(k2, (H, W)) < 0.5).astype(jnp.float32)  # k-space mask
    lam = 0.05

    x = conjugated_grad(rhs, mask, lam)
    x = jax.block_until_ready(x)

    x_ref = _reference(rhs, mask, lam)
    rel_err = float(jnp.max(jnp.abs(x - x_ref)) / (jnp.max(jnp.abs(x_ref)) + 1e-8))
    assert rel_err < 2e-2, f"kernel vs reference mismatch, rel err {rel_err}"
    print("KERNEL_OK")
</pallas_src>

<mosaic_0001>
module attributes {stable_mosaic.version = 11 : i64} {
  func.func @kernel(%arg0: i32, %arg1: memref<1xf32, #tpu.memory_space<smem>>, %arg2: memref<1x32x16xf32, #tpu.memory_space<vmem>>, %arg3: memref<32x16xf32, #tpu.memory_space<vmem>>, %arg4: memref<32x32xf32, #tpu.memory_space<vmem>>, %arg5: memref<32x32xf32, #tpu.memory_space<vmem>>, %arg6: memref<16x16xf32, #tpu.memory_space<vmem>>, %arg7: memref<16x16xf32, #tpu.memory_space<vmem>>, %arg8: memref<16x16xf32, #tpu.memory_space<vmem>>, %arg9: memref<16x16xf32, #tpu.memory_space<vmem>>, %arg10: memref<1x32x16xf32, #tpu.memory_space<vmem>>) attributes {dimension_semantics = [#tpu.dimension_semantics<parallel>], iteration_bounds = array<i64: 2>, scalar_prefetch = 0 : i64, scratch_operands = 0 : i64, tpu.core_type = #tpu.core_type<tc>, window_params = [{transform_indices = @transform_0, window_bounds = array<i64: 1>}, {transform_indices = @transform_1, window_bounds = array<i64: 1, 32, 16>}, {pipeline_mode = #tpu.pipeline_mode<synchronous>, transform_indices = @transform_2, window_bounds = array<i64: 32, 16>}, {pipeline_mode = #tpu.pipeline_mode<synchronous>, transform_indices = @transform_3, window_bounds = array<i64: 32, 32>}, {pipeline_mode = #tpu.pipeline_mode<synchronous>, transform_indices = @transform_4, window_bounds = array<i64: 32, 32>}, {pipeline_mode = #tpu.pipeline_mode<synchronous>, transform_indices = @transform_5, window_bounds = array<i64: 16, 16>}, {pipeline_mode = #tpu.pipeline_mode<synchronous>, transform_indices = @transform_6, window_bounds = array<i64: 16, 16>}, {pipeline_mode = #tpu.pipeline_mode<synchronous>, transform_indices = @transform_7, window_bounds = array<i64: 16, 16>}, {pipeline_mode = #tpu.pipeline_mode<synchronous>, transform_indices = @transform_8, window_bounds = array<i64: 16, 16>}, {transform_indices = @transform_9, window_bounds = array<i64: 1, 32, 16>}]} {
    %c0 = arith.constant 0 : index
    %0 = memref.load %arg1[%c0] : memref<1xf32, #tpu.memory_space<smem>>
    %c0_0 = arith.constant 0 : index
    %c0_1 = arith.constant 0 : index
    %1 = vector.load %arg3[%c0_0, %c0_1] : memref<32x16xf32, #tpu.memory_space<vmem>>, vector<32x16xf32>
    %c0_2 = arith.constant 0 : index
    %c0_3 = arith.constant 0 : index
    %2 = vector.load %arg4[%c0_2, %c0_3] : memref<32x32xf32, #tpu.memory_space<vmem>>, vector<32x32xf32>
    %c0_4 = arith.constant 0 : index
    %c0_5 = arith.constant 0 : index
    %3 = vector.load %arg5[%c0_4, %c0_5] : memref<32x32xf32, #tpu.memory_space<vmem>>, vector<32x32xf32>
    %c0_6 = arith.constant 0 : index
    %c0_7 = arith.constant 0 : index
    %4 = vector.load %arg6[%c0_6, %c0_7] : memref<16x16xf32, #tpu.memory_space<vmem>>, vector<16x16xf32>
    %c0_8 = arith.constant 0 : index
    %c0_9 = arith.constant 0 : index
    %5 = vector.load %arg7[%c0_8, %c0_9] : memref<16x16xf32, #tpu.memory_space<vmem>>, vector<16x16xf32>
    %c0_10 = arith.constant 0 : index
    %c0_11 = arith.constant 0 : index
    %6 = vector.load %arg8[%c0_10, %c0_11] : memref<16x16xf32, #tpu.memory_space<vmem>>, vector<16x16xf32>
    %c0_12 = arith.constant 0 : index
    %c0_13 = arith.constant 0 : index
    %7 = vector.load %arg9[%c0_12, %c0_13] : memref<16x16xf32, #tpu.memory_space<vmem>>, vector<16x16xf32>
    %c0_14 = arith.constant 0 : index
    %c0_15 = arith.constant 0 : index
    %c0_16 = arith.constant 0 : index
    %8 = vector.load %arg2[%c0_14, %c0_15, %c0_16] : memref<1x32x16xf32, #tpu.memory_space<vmem>>, vector<1x32x16xf32>
    %9 = vector.shape_cast %8 : vector<1x32x16xf32> to vector<32x16xf32>
    %cst = arith.constant 0.000000e+00 : f32
    %10 = vector.broadcast %cst : f32 to vector<32x16xf32>
    %11 = arith.mulf %9, %9 : vector<32x16xf32>
    %12 = vector.shape_cast %11 : vector<32x16xf32> to vector<1x32x16xf32>
    %cst_17 = arith.constant dense<0.000000e+00> : vector<1xf32>
    %13 = vector.multi_reduction <add>, %12, %cst_17 [1, 2] : vector<1x32x16xf32> to vector<1xf32>
    %14 = vector.shape_cast %13 : vector<1xf32> to vector<1x1x1xf32>
    %15 = vector.extract %14[0, 0, 0] : f32 from vector<1x1x1xf32>
    %c0_i32 = arith.constant 0 : i32
    %c0_i32_18 = arith.constant 0 : i32
    %16:6 = scf.while (%arg11 = %c0_i32, %arg12 = %c0_i32_18, %arg13 = %10, %arg14 = %9, %arg15 = %9, %arg16 = %15) : (i32, i32, vector<32x16xf32>, vector<32x16xf32>, vector<32x16xf32>, f32) -> (i32, i32, vector<32x16xf32>, vector<32x16xf32>, vector<32x16xf32>, f32) {
      %c10_i32 = arith.constant 10 : i32
      %20 = arith.cmpi slt, %arg11, %c10_i32 : i32
      %c0_i32_22 = arith.constant 0 : i32
      %21 = arith.cmpi eq, %arg12, %c0_i32_22 : i32
      %22 = arith.andi %20, %21 : i1
      scf.condition(%22) %arg11, %arg12, %arg13, %arg14, %arg15, %arg16 : i32, i32, vector<32x16xf32>, vector<32x16xf32>, vector<32x16xf32>, f32
    } do {
    ^bb0(%arg11: i32, %arg12: i32, %arg13: vector<32x16xf32>, %arg14: vector<32x16xf32>, %arg15: vector<32x16xf32>, %arg16: f32):
      %cst_22 = arith.constant dense<0.000000e+00> : vector<32x16xf32>
      %20 = tpu.matmul %2, %arg15, %cst_22 {dimension_numbers = #tpu.dot_dimension_numbers<[1], [0], [0], [1], [0, 0, 1, 1], [], []>} : vector<32x32xf32>, vector<32x16xf32>, vector<32x16xf32> -> vector<32x16xf32>
      %cst_23 = arith.constant dense<0.000000e+00> : vector<32x16xf32>
      %21 = tpu.matmul %20, %4, %cst_23 {dimension_numbers = #tpu.dot_dimension_numbers<[1], [0], [0], [1], [0, 0, 1, 1], [], []>} : vector<32x16xf32>, vector<16x16xf32>, vector<32x16xf32> -> vector<32x16xf32>
      %cst_24 = arith.constant dense<0.000000e+00> : vector<32x16xf32>
      %22 = tpu.matmul %20, %5, %cst_24 {dimension_numbers = #tpu.dot_dimension_numbers<[1], [0], [0], [1], [0, 0, 1, 1], [], []>} : vector<32x16xf32>, vector<16x16xf32>, vector<32x16xf32> -> vector<32x16xf32>
      %23 = vector.extract_strided_slice %21 {offsets = [0, 0], sizes = [16, 16], strides = [1, 1]} : vector<32x16xf32> to vector<16x16xf32>
      %24 = vector.extract_strided_slice %22 {offsets = [16, 0], sizes = [16, 16], strides = [1, 1]} : vector<32x16xf32> to vector<16x16xf32>
      %25 = arith.subf %23, %24 : vector<16x16xf32>
      %26 = vector.extract_strided_slice %22 {offsets = [0, 0], sizes = [16, 16], strides = [1, 1]} : vector<32x16xf32> to vector<16x16xf32>
      %27 = vector.extract_strided_slice %21 {offsets = [16, 0], sizes = [16, 16], strides = [1, 1]} : vector<32x16xf32> to vector<16x16xf32>
      %28 = arith.addf %26, %27 : vector<16x16xf32>
      %29 = tpu.concatenate %25, %28 in 0 : vector<16x16xf32>, vector<16x16xf32> -> vector<32x16xf32>
      %30 = arith.mulf %29, %1 : vector<32x16xf32>
      %cst_25 = arith.constant dense<0.000000e+00> : vector<32x16xf32>
      %31 = tpu.matmul %3, %30, %cst_25 {dimension_numbers = #tpu.dot_dimension_numbers<[1], [0], [0], [1], [0, 0, 1, 1], [], []>} : vector<32x32xf32>, vector<32x16xf32>, vector<32x16xf32> -> vector<32x16xf32>
      %cst_26 = arith.constant dense<0.000000e+00> : vector<32x16xf32>
      %32 = tpu.matmul %31, %6, %cst_26 {dimension_numbers = #tpu.dot_dimension_numbers<[1], [0], [0], [1], [0, 0, 1, 1], [], []>} : vector<32x16xf32>, vector<16x16xf32>, vector<32x16xf32> -> vector<32x16xf32>
      %cst_27 = arith.constant dense<0.000000e+00> : vector<32x16xf32>
      %33 = tpu.matmul %31, %7, %cst_27 {dimension_numbers = #tpu.dot_dimension_numbers<[1], [0], [0], [1], [0, 0, 1, 1], [], []>} : vector<32x16xf32>, vector<16x16xf32>, vector<32x16xf32> -> vector<32x16xf32>
      %34 = vector.extract_strided_slice %32 {offsets = [0, 0], sizes = [16, 16], strides = [1, 1]} : vector<32x16xf32> to vector<16x16xf32>
      %35 = vector.extract_strided_slice %33 {offsets = [16, 0], sizes = [16, 16], strides = [1, 1]} : vector<32x16xf32> to vector<16x16xf32>
      %36 = arith.subf %34, %35 : vector<16x16xf32>
      %37 = vector.extract_strided_slice %33 {offsets = [0, 0], sizes = [16, 16], strides = [1, 1]} : vector<32x16xf32> to vector<16x16xf32>
      %38 = vector.extract_strided_slice %32 {offsets = [16, 0], sizes = [16, 16], strides = [1, 1]} : vector<32x16xf32> to vector<16x16xf32>
      %39 = arith.addf %37, %38 : vector<16x16xf32>
      %40 = tpu.concatenate %36, %39 in 0 : vector<16x16xf32>, vector<16x16xf32> -> vector<32x16xf32>
      %41 = vector.broadcast %0 : f32 to vector<32x16xf32>
      %42 = arith.mulf %41, %arg15 : vector<32x16xf32>
      %43 = arith.addf %40, %42 : vector<32x16xf32>
      %44 = arith.mulf %arg15, %43 : vector<32x16xf32>
      %45 = vector.shape_cast %44 : vector<32x16xf32> to vector<1x32x16xf32>
      %cst_28 = arith.constant dense<0.000000e+00> : vector<1xf32>
      %46 = vector.multi_reduction <add>, %45, %cst_28 [1, 2] : vector<1x32x16xf32> to vector<1xf32>
      %47 = vector.shape_cast %46 : vector<1xf32> to vector<1x1x1xf32>
      %48 = vector.extract %47[0, 0, 0] : f32 from vector<1x1x1xf32>
      %49 = arith.divf %arg16, %48 : f32
      %50 = vector.broadcast %49 : f32 to vector<32x16xf32>
      %51 = arith.mulf %50, %arg15 : vector<32x16xf32>
      %52 = arith.addf %arg13, %51 : vector<32x16xf32>
      %53 = vector.broadcast %49 : f32 to vector<32x16xf32>
      %54 = arith.mulf %53, %43 : vector<32x16xf32>
      %55 = arith.subf %arg14, %54 : vector<32x16xf32>
      %56 = arith.mulf %55, %55 : vector<32x16xf32>
      %57 = vector.shape_cast %56 : vector<32x16xf32> to vector<1x32x16xf32>
      %cst_29 = arith.constant dense<0.000000e+00> : vector<1xf32>
      %58 = vector.multi_reduction <add>, %57, %cst_29 [1, 2] : vector<1x32x16xf32> to vector<1xf32>
      %59 = vector.shape_cast %58 : vector<1xf32> to vector<1x1x1xf32>
      %60 = vector.extract %59[0, 0, 0] : f32 from vector<1x1x1xf32>
      %61 = arith.divf %60, %arg16 : f32
      %62 = vector.broadcast %61 : f32 to vector<32x16xf32>
      %63 = arith.mulf %62, %arg15 : vector<32x16xf32>
      %64 = arith.addf %55, %63 : vector<32x16xf32>
      %cst_30 = arith.constant 1.000000e-10 : f32
      %65 = arith.cmpf olt, %60, %cst_30 : f32
      %66 = arith.extui %65 : i1 to i32
      %c1_i32 = arith.constant 1 : i32
      %67 = arith.addi %arg11, %c1_i32 : i32
      scf.yield %67, %66, %52, %55, %64, %60 : i32, i32, vector<32x16xf32>, vector<32x16xf32>, vector<32x16xf32>, f32
    }
    %c0_19 = arith.constant 0 : index
    %c0_20 = arith.constant 0 : index
    %c0_21 = arith.constant 0 : index
    %17 = vector.load %arg10[%c0_19, %c0_20, %c0_21] : memref<1x32x16xf32, #tpu.memory_space<vmem>>, vector<1x32x16xf32>
    %18 = vector.shape_cast %17 : vector<1x32x16xf32> to vector<32x16xf32>
    %19 = vector.shape_cast %16#2 : vector<32x16xf32> to vector<1x32x16xf32>
    tpu.vector_store %arg10[%c0_19, %c0_20, %c0_21], %19 {strides = array<i32>} : memref<1x32x16xf32, #tpu.memory_space<vmem>>, vector<1x32x16xf32>,
    return
  }
  func.func @transform_0(%arg0: i32) -> i32 {
    %c0_i32 = arith.constant 0 : i32
    %c0_i32_0 = arith.constant 0 : i32
    return %c0_i32 : i32
  }
  func.func @transform_1(%arg0: i32) -> (i32, i32, i32) {
    %c0_i32 = arith.constant 0 : i32
    %c0_i32_0 = arith.constant 0 : i32
    %c0_i32_1 = arith.constant 0 : i32
    return %arg0, %c0_i32, %c0_i32_0 : i32, i32, i32
  }
  func.func @transform_2(%arg0: i32) -> (i32, i32) {
    %c0_i32 = arith.constant 0 : i32
    %c0_i32_0 = arith.constant 0 : i32
    %c0_i32_1 = arith.constant 0 : i32
    return %c0_i32, %c0_i32_0 : i32, i32
  }
  func.func @transform_3(%arg0: i32) -> (i32, i32) {
    %c0_i32 = arith.constant 0 : i32
    %c0_i32_0 = arith.constant 0 : i32
    %c0_i32_1 = arith.constant 0 : i32
    return %c0_i32, %c0_i32_0 : i32, i32
  }
  func.func @transform_4(%arg0: i32) -> (i32, i32) {
    %c0_i32 = arith.constant 0 : i32
    %c0_i32_0 = arith.constant 0 : i32
    %c0_i32_1 = arith.constant 0 : i32
    return %c0_i32, %c0_i32_0 : i32, i32
  }
  func.func @transform_5(%arg0: i32) -> (i32, i32) {
    %c0_i32 = arith.constant 0 : i32
    %c0_i32_0 = arith.constant 0 : i32
    %c0_i32_1 = arith.constant 0 : i32
    return %c0_i32, %c0_i32_0 : i32, i32
  }
  func.func @transform_6(%arg0: i32) -> (i32, i32) {
    %c0_i32 = arith.constant 0 : i32
    %c0_i32_0 = arith.constant 0 : i32
    %c0_i32_1 = arith.constant 0 : i32
    return %c0_i32, %c0_i32_0 : i32, i32
  }
  func.func @transform_7(%arg0: i32) -> (i32, i32) {
    %c0_i32 = arith.constant 0 : i32
    %c0_i32_0 = arith.constant 0 : i32
    %c0_i32_1 = arith.constant 0 : i32
    return %c0_i32, %c0_i32_0 : i32, i32
  }
  func.func @transform_8(%arg0: i32) -> (i32, i32) {
    %c0_i32 = arith.constant 0 : i32
    %c0_i32_0 = arith.constant 0 : i32
    %c0_i32_1 = arith.constant 0 : i32
    return %c0_i32, %c0_i32_0 : i32, i32
  }
  func.func @transform_9(%arg0: i32) -> (i32, i32, i32) {
    %c0_i32 = arith.constant 0 : i32
    %c0_i32_0 = arith.constant 0 : i32
    %c0_i32_1 = arith.constant 0 : i32
    return %arg0, %c0_i32, %c0_i32_0 : i32, i32, i32
  }
}

</mosaic_0001>

<llo_original>
// kernel: tpu_custom_call.1
$region0: #{tpu_custom_call.1}
  #allocation0 [shape = 'u32[]', space=smem, size = 0x4, offset = 0x4, fixed_abs, tag = 'smem constant byte address 0x4 - core index']
  #allocation1 [shape = 'u32[144,128]{1,0:T(1,128)}', space=vmem, size = 0x12000, scoped, tag = 'internal scratch']
  #allocation2 [shape = 'f32[1]{0:T(128)S(6)}', space=smem, size = 0x200, scoped, tag = 'scoped memory for tpu_custom_call.1']
  %s0 = inlined_call_operand.<no memory space> [shape: f32[1], index: 0, kind: input, shape index: {}]
  %s1 = inlined_call_operand.vmem [shape: f32[2,32,16], index: 1, kind: input, shape index: {}]
  %s2 = inlined_call_operand.vmem [shape: f32[32,16], index: 2, kind: input, shape index: {}]
  %s3 = inlined_call_operand.vmem [shape: f32[32,32], index: 3, kind: input, shape index: {}]
  %s4 = inlined_call_operand.vmem [shape: f32[32,32], index: 4, kind: input, shape index: {}]
  %s5 = inlined_call_operand.vmem [shape: f32[16,16], index: 5, kind: input, shape index: {}]
  %s6 = inlined_call_operand.vmem [shape: f32[16,16], index: 6, kind: input, shape index: {}]
  %s7 = inlined_call_operand.vmem [shape: f32[16,16], index: 7, kind: input, shape index: {}]
  %s8 = inlined_call_operand.hbm [shape: f32[16,16], index: 8, kind: input, shape index: {}]
  %s9 = inlined_call_operand.vmem [shape: f32[2,32,16], index: 9, kind: output, shape index: {}]
  %s10 = sld [smem:[#allocation0]]
  $region80: #{tpu_custom_call.1} parent=0
    _
  %s12 = ssub.s32 1, %s10
  %s13 = scalar_select 0, %s12, %s10
  %14 = sst [smem:[#allocation2]] %s0
  $region1: #{tpu_custom_call.1} parent=0
    #allocation3 [shape = 'u8[8192]{0}', space=vmem, size = 0x2000, scoped, tag = 'input window, operand 8, single buffered']
    #allocation4 [shape = 's32[2]{0}', space=sflag, size = 0x8, scoped, tag = 'scoped memory for tpu_custom_call.1']
    %15 = vsyncpa [#allocation4], 0
    loop: start=0, step=1, limit=4
    $region2: #{tpu_custom_call.1} parent=1 // loop_pre_header
      _
    $region3: #{tpu_custom_call.1} parent=1 // loop_header
      %s17 = sphi 0, %s21
      %p18 = scmp.ge.s32.totalorder %s17, 4
      %s25 = sphi 0, %s25
      %s27 = sphi 0, %s25
      %s28 = sphi 0, %s27
      %s42 = sphi 0, %s28
      %s48 = sphi 0, %s50
      %s51 = sphi 0, %s48
      %s52 = sphi 0, %s51
      %s68 = sphi 0, %s52
      %s72 = sphi 0, %s72
      %s74 = sphi 0, %s72
      %s75 = sphi 0, %s74
      %s89 = sphi 0, %s75
      %s93 = sphi 0, %s93
      %s95 = sphi 0, %s93
      %s96 = sphi 0, %s95
      %s110 = sphi 0, %s96
      %s114 = sphi 0, %s114
      %s116 = sphi 0, %s114
      %s117 = sphi 0, %s116
      %s131 = sphi 0, %s117
      %s135 = sphi 0, %s135
      %s137 = sphi 0, %s135
      %s138 = sphi 0, %s137
      %s152 = sphi 0, %s138
      %s156 = sphi 0, %s156
      %s158 = sphi 0, %s156
      %s159 = sphi 0, %s158
      %s173 = sphi 0, %s159
      %s177 = sphi 0, %s177
      %s179 = sphi 0, %s177
      %s180 = sphi 0, %s179
      %s194 = sphi 0, %s180
      %s198 = sphi 0, %s198
      %s200 = sphi 0, %s198
      %s201 = sphi 0, %s200
      %s215 = sphi 0, %s201
      %s221 = sphi 0, %s223
      %s224 = sphi 0, %s221
      %s225 = sphi 0, %s224
      %s241 = sphi 0, %s225
    $region4: #{tpu_custom_call.1} parent=1 // loop_header_branch
      %20 = sbr.rel (%p18) target = $region8
    $region5: #{tpu_custom_call.1} parent=1 // loop_body
      %s22 = ssub.s32 %s17, 1
      %s23 = ssub.s32 %s17, 2
      %s24 = sadd.s32 %s17, 1
      %s26 = sadd.s32 %s25, 1
      %p29 = scmp.eq.s32.totalorder %s17, 1
      %p30 = scmp.ne.s32.totalorder %s25, %s27
      %p31 = scmp.eq.s32.totalorder %s17, 0
      %p32 = por %p30, %p31
      %p33 = scmp.ne.s32.totalorder %s25, %s27
      %p34 = scmp.eq.s32.totalorder %s22, 1
      %p35 = por %p33, %p34
      %p36 = scmp.ne.s32.totalorder %s27, %s28
      %p37 = scmp.eq.s32.totalorder %s22, 0
      %p38 = por %p36, %p37
      %p39 = scmp.ne.s32.totalorder %s27, %s28
      %p40 = scmp.eq.s32.totalorder %s23, 1
      %p41 = por %p39, %p40
      %p43 = scmp.ne.s32.totalorder %s28, %s42
      %p44 = scmp.eq.s32.totalorder %s23, 0
      %p45 = por %p43, %p44
      %s46 = ssub.s32 %s17, %s24
      %p47 = scmp.eq.s32.totalorder %s46, 0
      %s49 = sadd.s32 %s48, 1
      %s50 = scalar_select %p47, %s48, %s49
      %p53 = pneg %p47
      %p54 = scmp.eq.s32.totalorder %s17, 1
      %p55 = por %p53, %p54
      %p56 = scmp.ne.s32.totalorder %s48, %s51
      %p57 = scmp.eq.s32.totalorder %s17, 0
      %p58 = por %p56, %p57
      %p59 = scmp.ne.s32.totalorder %s48, %s51
      %p60 = scmp.eq.s32.totalorder %s22, 1
      %p61 = por %p59, %p60
      %p62 = scmp.ne.s32.totalorder %s51, %s52
      %p63 = scmp.eq.s32.totalorder %s22, 0
      %p64 = por %p62, %p63
      %p65 = scmp.ne.s32.totalorder %s51, %s52
      %p66 = scmp.eq.s32.totalorder %s23, 1
      %p67 = por %p65, %p66
      %p69 = scmp.ne.s32.totalorder %s52, %s68
      %p70 = scmp.eq.s32.totalorder %s23, 0
      %p71 = por %p69, %p70
      %s73 = sadd.s32 %s72, 1
      %p76 = scmp.eq.s32.totalorder %s17, 1
      %p77 = scmp.ne.s32.totalorder %s72, %s74
      %p78 = scmp.eq.s32.totalorder %s17, 0
      %p79 = por %p77, %p78
      %p80 = scmp.ne.s32.totalorder %s72, %s74
      %p81 = scmp.eq.s32.totalorder %s22, 1
      %p82 = por %p80, %p81
      %p83 = scmp.ne.s32.totalorder %s74, %s75
      %p84 = scmp.eq.s32.totalorder %s22, 0
      %p85 = por %p83, %p84
      %p86 = scmp.ne.s32.totalorder %s74, %s75
      %p87 = scmp.eq.s32.totalorder %s23, 1
      %p88 = por %p86, %p87
      %p90 = scmp.ne.s32.totalorder %s75, %s89
      %p91 = scmp.eq.s32.totalorder %s23, 0
      %p92 = por %p90, %p91
      %s94 = sadd.s32 %s93, 1
      %p97 = scmp.eq.s32.totalorder %s17, 1
      %p98 = scmp.ne.s32.totalorder %s93, %s95
      %p99 = scmp.eq.s32.totalorder %s17, 0
      %p100 = por %p98, %p99
      %p101 = scmp.ne.s32.totalorder %s93, %s95
      %p102 = scmp.eq.s32.totalorder %s22, 1
      %p103 = por %p101, %p102
      %p104 = scmp.ne.s32.totalorder %s95, %s96
      %p105 = scmp.eq.s32.totalorder %s22, 0
      %p106 = por %p104, %p105
      %p107 = scmp.ne.s32.totalorder %s95, %s96
      %p108 = scmp.eq.s32.totalorder %s23, 1
      %p109 = por %p107, %p108
      %p111 = scmp.ne.s32.totalorder %s96, %s110
      %p112 = scmp.eq.s32.totalorder %s23, 0
      %p113 = por %p111, %p112
      %s115 = sadd.s32 %s114, 1
      %p118 = scmp.eq.s32.totalorder %s17, 1
      %p119 = scmp.ne.s32.totalorder %s114, %s116
      %p120 = scmp.eq.s32.totalorder %s17, 0
      %p121 = por %p119, %p120
      %p122 = scmp.ne.s32.totalorder %s114, %s116
      %p123 = scmp.eq.s32.totalorder %s22, 1
      %p124 = por %p122, %p123
      %p125 = scmp.ne.s32.totalorder %s116, %s117
      %p126 = scmp.eq.s32.totalorder %s22, 0
      %p127 = por %p125, %p126
      %p128 = scmp.ne.s32.totalorder %s116, %s117
      %p129 = scmp.eq.s32.totalorder %s23, 1
      %p130 = por %p128, %p129
      %p132 = scmp.ne.s32.totalorder %s117, %s131
      %p133 = scmp.eq.s32.totalorder %s23, 0
      %p134 = por %p132, %p133
      %s136 = sadd.s32 %s135, 1
      %p139 = scmp.eq.s32.totalorder %s17, 1
      %p140 = scmp.ne.s32.totalorder %s135, %s137
      %p141 = scmp.eq.s32.totalorder %s17, 0
      %p142 = por %p140, %p141
      %p143 = scmp.ne.s32.totalorder %s135, %s137
      %p144 = scmp.eq.s32.totalorder %s22, 1
      %p145 = por %p143, %p144
      %p146 = scmp.ne.s32.totalorder %s137, %s138
      %p147 = scmp.eq.s32.totalorder %s22, 0
      %p148 = por %p146, %p147
      %p149 = scmp.ne.s32.totalorder %s137, %s138
      %p150 = scmp.eq.s32.totalorder %s23, 1
      %p151 = por %p149, %p150
      %p153 = scmp.ne.s32.totalorder %s138, %s152
      %p154 = scmp.eq.s32.totalorder %s23, 0
      %p155 = por %p153, %p154
      %s157 = sadd.s32 %s156, 1
      %p160 = scmp.eq.s32.totalorder %s17, 1
      %p161 = scmp.ne.s32.totalorder %s156, %s158
      %p162 = scmp.eq.s32.totalorder %s17, 0
      %p163 = por %p161, %p162
      %p164 = scmp.ne.s32.totalorder %s156, %s158
      %p165 = scmp.eq.s32.totalorder %s22, 1
      %p166 = por %p164, %p165
      %p167 = scmp.ne.s32.totalorder %s158, %s159
      %p168 = scmp.eq.s32.totalorder %s22, 0
      %p169 = por %p167, %p168
      %p170 = scmp.ne.s32.totalorder %s158, %s159
      %p171 = scmp.eq.s32.totalorder %s23, 1
      %p172 = por %p170, %p171
      %p174 = scmp.ne.s32.totalorder %s159, %s173
      %p175 = scmp.eq.s32.totalorder %s23, 0
      %p176 = por %p174, %p175
      %s178 = sadd.s32 %s177, 1
      %p181 = scmp.eq.s32.totalorder %s17, 1
      %p182 = scmp.ne.s32.totalorder %s177, %s179
      %p183 = scmp.eq.s32.totalorder %s17, 0
      %p184 = por %p182, %p183
      %p185 = scmp.ne.s32.totalorder %s177, %s179
      %p186 = scmp.eq.s32.totalorder %s22, 1
      %p187 = por %p185, %p186
      %p188 = scmp.ne.s32.totalorder %s179, %s180
      %p189 = scmp.eq.s32.totalorder %s22, 0
      %p190 = por %p188, %p189
      %p191 = scmp.ne.s32.totalorder %s179, %s180
      %p192 = scmp.eq.s32.totalorder %s23, 1
      %p193 = por %p191, %p192
      %p195 = scmp.ne.s32.totalorder %s180, %s194
      %p196 = scmp.eq.s32.totalorder %s23, 0
      %p197 = por %p195, %p196
      %s199 = sadd.s32 %s198, 1
      %p202 = scmp.eq.s32.totalorder %s17, 1
      %p203 = scmp.ne.s32.totalorder %s198, %s200
      %p204 = scmp.eq.s32.totalorder %s17, 0
      %p205 = por %p203, %p204
      %p206 = scmp.ne.s32.totalorder %s198, %s200
      %p207 = scmp.eq.s32.totalorder %s22, 1
      %p208 = por %p206, %p207
      %p209 = scmp.ne.s32.totalorder %s200, %s201
      %p210 = scmp.eq.s32.totalorder %s22, 0
      %p211 = por %p209, %p210
      %p212 = scmp.ne.s32.totalorder %s200, %s201
      %p213 = scmp.eq.s32.totalorder %s23, 1
      %p214 = por %p212, %p213
      %p216 = scmp.ne.s32.totalorder %s201, %s215
      %p217 = scmp.eq.s32.totalorder %s23, 0
      %p218 = por %p216, %p217
      %s219 = ssub.s32 %s17, %s24
      %p220 = scmp.eq.s32.totalorder %s219, 0
      %s222 = sadd.s32 %s221, 1
      %s223 = scalar_select %p220, %s221, %s222
      %p226 = pneg %p220
      %p227 = scmp.eq.s32.totalorder %s17, 1
      %p228 = por %p226, %p227
      %p229 = scmp.ne.s32.totalorder %s221, %s224
      %p230 = scmp.eq.s32.totalorder %s17, 0
      %p231 = por %p229, %p230
      %p232 = scmp.ne.s32.totalorder %s221, %s224
      %p233 = scmp.eq.s32.totalorder %s22, 1
      %p234 = por %p232, %p233
      %p235 = scmp.ne.s32.totalorder %s224, %s225
      %p236 = scmp.eq.s32.totalorder %s22, 0
      %p237 = por %p235, %p236
      %p238 = scmp.ne.s32.totalorder %s224, %s225
      %p239 = scmp.eq.s32.totalorder %s23, 1
      %p240 = por %p238, %p239
      %p242 = scmp.ne.s32.totalorder %s225, %s241
      %p243 = scmp.eq.s32.totalorder %s23, 0
      %p244 = por %p242, %p243
      %p245 = scmp.le.s32.totalorder 1, %s17
      %p246 = scmp.lt.s32.totalorder %s17, 3
      %p247 = pnand %p245, %p246
      %p248 = pneg %p247
      // Predicated region
      $region9: #{tpu_custom_call.1} parent=5 // pred_check
        _
      $region10: #{tpu_custom_call.1} parent=5 // pred_check_branch
        %250 = sbr.rel (%p247) target = $region12
      $region11: #{tpu_custom_call.1} parent=5 // pred_region
        %s251 = ssub.s32 %s17, 1
        // Predicated region
        $region13: #{tpu_custom_call.1} parent=11 // pred_check
          %p252 = pneg %p38
        $region14: #{tpu_custom_call.1} parent=11 // pred_check_branch
          %254 = sbr.rel (%p252) target = $region16
        $region15: #{tpu_custom_call.1} parent=11 // pred_region
          _
        $region16: #{tpu_custom_call.1} parent=11 // pred_fallthru
          _
        // Predicated region
        $region17: #{tpu_custom_call.1} parent=11 // pred_check
          %p255 = pneg %p85
        $region18: #{tpu_custom_call.1} parent=11 // pred_check_branch
          %257 = sbr.rel (%p255) target = $region20
        $region19: #{tpu_custom_call.1} parent=11 // pred_region
          _
        $region20: #{tpu_custom_call.1} parent=11 // pred_fallthru
          _
        // Predicated region
        $region21: #{tpu_custom_call.1} parent=11 // pred_check
          %p258 = pneg %p106
        $region22: #{tpu_custom_call.1} parent=11 // pred_check_branch
          %260 = sbr.rel (%p258) target = $region24
        $region23: #{tpu_custom_call.1} parent=11 // pred_region
          _
        $region24: #{tpu_custom_call.1} parent=11 // pred_fallthru
          _
        // Predicated region
        $region25: #{tpu_custom_call.1} parent=11 // pred_check
          %p261 = pneg %p127
        $region26: #{tpu_custom_call.1} parent=11 // pred_check_branch
          %263 = sbr.rel (%p261) target = $region28
        $region27: #{tpu_custom_call.1} parent=11 // pred_region
          _
        $region28: #{tpu_custom_call.1} parent=11 // pred_fallthru
          _
        // Predicated region
        $region29: #{tpu_custom_call.1} parent=11 // pred_check
          %p264 = pneg %p148
        $region30: #{tpu_custom_call.1} parent=11 // pred_check_branch
          %266 = sbr.rel (%p264) target = $region32
        $region31: #{tpu_custom_call.1} parent=11 // pred_region
          _
        $region32: #{tpu_custom_call.1} parent=11 // pred_fallthru
          _
        // Predicated region
        $region33: #{tpu_custom_call.1} parent=11 // pred_check
          %p267 = pneg %p169
        $region34: #{tpu_custom_call.1} parent=11 // pred_check_branch
          %269 = sbr.rel (%p267) target = $region36
        $region35: #{tpu_custom_call.1} parent=11 // pred_region
          _
        $region36: #{tpu_custom_call.1} parent=11 // pred_fallthru
          _
        // Predicated region
        $region37: #{tpu_custom_call.1} parent=11 // pred_check
          %p270 = pneg %p190
        $region38: #{tpu_custom_call.1} parent=11 // pred_check_branch
          %272 = sbr.rel (%p270) target = $region40
        $region39: #{tpu_custom_call.1} parent=11 // pred_region
          _
        $region40: #{tpu_custom_call.1} parent=11 // pred_fallthru
          _
        // Predicated region
        $region41: #{tpu_custom_call.1} parent=11 // pred_check
          %p273 = pneg %p211
        $region42: #{tpu_custom_call.1} parent=11 // pred_check_branch
          %275 = sbr.rel (%p273) target = $region44
        $region43: #{tpu_custom_call.1} parent=11 // pred_region
          %s277 = ssub.s32 256, 256
          %278 = vsyncadd [#allocation4], %s277
          %s279 = sshll.u32 [#allocation3], 4
          %s280 = int_to_ptr.vmem [resolvable:$true] %s279
          %285 = dma.hbm_to_vmem [thread:$0]  %s8, 256, %s280, [#allocation4], 128, 128, 8
        $region44: #{tpu_custom_call.1} parent=11 // pred_fallthru
          _
      $region12: #{tpu_custom_call.1} parent=5 // pred_fallthru
        _
      %p286 = scmp.lt.s32.totalorder %s17, 2
      // Predicated region
      $region45: #{tpu_custom_call.1} parent=5 // pred_check
        %p287 = pneg %p286
      $region46: #{tpu_custom_call.1} parent=5 // pred_check_branch
        %289 = sbr.rel (%p287) target = $region48
      $region47: #{tpu_custom_call.1} parent=5 // pred_region
        // Predicated region
        $region49: #{tpu_custom_call.1} parent=47 // pred_check
          %p290 = pneg %p58
        $region50: #{tpu_custom_call.1} parent=47 // pred_check_branch
          %292 = sbr.rel (%p290) target = $region52
        $region51: #{tpu_custom_call.1} parent=47 // pred_region
          %p293 = scmp.lt.s32.totalorder %s17, 1
          %s294 = scalar_select %p293, %s17, 1
          %s295 = smul.addr %s294, 4
          %s296 = smul.addr %s295, 8
          %s297 = scalar_lea.vmem %s1, %s296
        $region52: #{tpu_custom_call.1} parent=47 // pred_fallthru
          _
      $region48: #{tpu_custom_call.1} parent=5 // pred_fallthru
        _
      %p298 = scmp.le.s32.totalorder 1, %s17
      %p299 = scmp.lt.s32.totalorder %s17, 3
      %p300 = pnand %p298, %p299
      %p301 = pneg %p300
      // Predicated region
      $region53: #{tpu_custom_call.1} parent=5 // pred_check
        _
      $region54: #{tpu_custom_call.1} parent=5 // pred_check_branch
        %303 = sbr.rel (%p300) target = $region56
      $region55: #{tpu_custom_call.1} parent=5 // pred_region
        %s304 = ssub.s32 %s17, 1
        // Predicated region
        $region57: #{tpu_custom_call.1} parent=55 // pred_check
          %p305 = pneg %p211
        $region58: #{tpu_custom_call.1} parent=55 // pred_check_branch
          %307 = sbr.rel (%p305) target = $region60
        $region59: #{tpu_custom_call.1} parent=55 // pred_region
          %308 = dma.done [#allocation4], 256
        $region60: #{tpu_custom_call.1} parent=55 // pred_fallthru
          _
        %p309 = pneg %p38
        %p310 = pneg %p35
        %p311 = scmp.lt.s32.totalorder %s22, 1
        %s312 = scalar_select %p311, %s22, 1
        %s313 = smul.addr %s312, 4
        %s314 = smul.addr %s313, 8
        %s315 = scalar_lea.vmem %s1, %s314
        %p316 = pneg %p64
        %p317 = pneg %p61
        %p318 = pneg %p85
        %p319 = pneg %p82
        %p320 = pneg %p106
        %p321 = pneg %p103
        %p322 = pneg %p127
        %p323 = pneg %p124
        %p324 = pneg %p148
        %p325 = pneg %p145
        %p326 = pneg %p169
        %p327 = pneg %p166
        %p328 = pneg %p190
        %p329 = pneg %p187
        %p330 = pneg %p211
        %p331 = pneg %p208
        %p332 = pneg %p237
        %p333 = pneg %p234
        %p334 = scmp.lt.s32.totalorder %s22, 1
        %s335 = scalar_select %p334, %s22, 1
        %s336 = smul.addr %s335, 4
        %s337 = smul.addr %s336, 8
        %s338 = scalar_lea.vmem %s9, %s337
        %p339 = scmp.lt.s32.totalorder %s22, 1
        %s340 = scalar_select %p339, %s22, 1
        %s341 = smul.addr %s340, 4
        %s342 = smul.addr %s341, 8
        %s343 = scalar_lea.vmem %s1, %s342
        %p344 = scmp.lt.s32.totalorder %s22, 1
        %s345 = scalar_select %p344, %s22, 1
        %s346 = smul.addr %s345, 4
        %s347 = smul.addr %s346, 8
        %s348 = scalar_lea.vmem %s9, %s347
        %s349 = sld [smem:[#allocation2]]
        %v350 = vld [vmem:[%s2] sm:$0xff]
        %v351 = vld [vmem:[%s2 + $0x8] sm:$0xff]
        %v352 = vld [vmem:[%s2 + $0x10] sm:$0xff]
        %v353 = vld [vmem:[%s2 + $0x18] sm:$0xff]
        %v354 = vld [vmem:[%s3] sm:$0xff]
        %v355 = vld [vmem:[%s3 + $0x8] sm:$0xff]
        %v356 = vld [vmem:[%s3 + $0x10] sm:$0xff]
        %v357 = vld [vmem:[%s3 + $0x18] sm:$0xff]
        %v358 = vld [vmem:[%s4] sm:$0xff]
        %v359 = vld [vmem:[%s4 + $0x8] sm:$0xff]
        %v360 = vld [vmem:[%s4 + $0x10] sm:$0xff]
        %v361 = vld [vmem:[%s4 + $0x18] sm:$0xff]
        %v362 = vld [vmem:[%s5] sm:$0xff]
        %v363 = vld [vmem:[%s5 + $0x8] sm:$0xff]
        %v364 = vld [vmem:[%s6] sm:$0xff]
        %v365 = vld [vmem:[%s6 + $0x8] sm:$0xff]
        %v366 = vld [vmem:[%s7] sm:$0xff]
        %v367 = vld [vmem:[%s7 + $0x8] sm:$0xff]
        %v368 = vld [vmem:[#allocation3] sm:$0xff]
        %v369 = vld [vmem:[#allocation3 + $0x8] sm:$0xff]
        %v370 = vld [vmem:[%s343] sm:$0xff]
        %v371 = vld [vmem:[%s343 + $0x8] sm:$0xff]
        %v372 = vld [vmem:[%s343 + $0x10] sm:$0xff]
        %v373 = vld [vmem:[%s343 + $0x18] sm:$0xff]
        %v374 = vmul.f32 %v370, %v370
        %v375 = vmul.f32 %v371, %v371
        %v376 = vmul.f32 %v372, %v372
        %v377 = vmul.f32 %v373, %v373
        %vm378 = vcmask 130048
        %v379 = vsel %vm378, %v374, 0.0
        %v380 = vsel %vm378, %v375, 0.0
        %v381 = vadd.f32 %v379, %v380
        %v382 = vsel %vm378, %v376, 0.0
        %v383 = vadd.f32 %v381, %v382
        %v384 = vsel %vm378, %v377, 0.0
        %v385 = vadd.f32 %v383, %v384
        %386 = vadd.xlane.f32.xlu0 %v385
        %v387 = vpop.xlane.xlu0 %386
        %v388 = vrot.slane %v387, 4
        %v389 = vadd.f32 %v387, %v388
        %v390 = vrot.slane %v389, 2
        %v391 = vadd.f32 %v389, %v390
        %v392 = vrot.slane %v391, 1
        %v393 = vadd.f32 %v391, %v392
        %s394 = vtos %v393
        // While loop
        $region61: #{tpu_custom_call.1} parent=55 // loop_pre_header
          _
        $region62: #{tpu_custom_call.1} parent=55 // loop_header
          %s396 = sphi 0, %s1073
          %s397 = sphi 0, %s1072
          %v398 = vphi 0.0, %v1026
          %v399 = vphi 0.0, %v1027
          %v400 = vphi 0.0, %v1028
          %v401 = vphi 0.0, %v1029
          %v402 = vphi %v370, %v1034
          %v403 = vphi %v371, %v1035
          %v404 = vphi %v372, %v1036
          %v405 = vphi %v373, %v1037
          %v406 = vphi %v370, %v1067
          %v407 = vphi %v371, %v1068
          %v408 = vphi %v372, %v1069
          %v409 = vphi %v373, %v1070
          %s410 = sphi %s394, %s1057
          %p411 = scmp.lt.s32.totalorder %s396, 10
          %p412 = scmp.eq.s32.totalorder %s397, 0
          %p413 = pnand %p411, %p412
          %p414 = pneg %p413
        $region63: #{tpu_custom_call.1} parent=55 // loop_header_branch
          %416 = sbr.rel (%p413) target = $region67
        $region64: #{tpu_custom_call.1} parent=55 // loop_body
          %vm417 = vcmask 261120
          %v419 = vsel %vm417, %v354, 0
          %v422 = vsel %vm417, %v355, 0
          %v425 = vsel %vm417, %v356, 0
          %v428 = vsel %vm417, %v357, 0
          %430 = vmatprep.subr.mxu0 0.0
          %431 = vmatpush1.msra.mxu0 0.0
          %432 = vmatprep.subr.mxu0 0.0
          %433 = vmatpush1.msra.mxu0 0.0
          %434 = vmatprep.subr.mxu0 0.0
          %435 = vmatpush1.msra.mxu0 0.0
          %436 = vmatprep.subr.mxu0 0.0
          %437 = vmatpush1.msra.mxu0 0.0
          %438 = vmatprep.subr.mxu0 0.0
          %439 = vmatpush1.msra.mxu0 0.0
          %440 = vmatprep.subr.mxu0 0.0
          %441 = vmatpush1.msra.mxu0 0.0
          %442 = vmatprep.subr.mxu0 0.0
          %443 = vmatpush1.msra.mxu0 0.0
          %444 = vmatprep.subr.mxu0 0.0
          %445 = vmatpush1.msra.mxu0 0.0
          %446 = vmatprep.subr.mxu0 0.0
          %447 = vmatpush1.msra.mxu0 0.0
          %448 = vmatprep.subr.mxu0 0.0
          %449 = vmatpush1.msra.mxu0 0.0
          %450 = vmatprep.subr.mxu0 0.0
          %451 = vmatpush1.msra.mxu0 0.0
          %452 = vmatprep.subr.mxu0 0.0
          %453 = vmatpush1.msra.mxu0 0.0
          %454 = vmatprep.subr.mxu0 0.0
          %455 = vmatpush1.msra.mxu0 %v409
          %456 = vmatprep.subr.mxu0 0.0
          %457 = vmatpush1.msra.mxu0 %v408
          %458 = vmatprep.subr.mxu0 0.0
          %459 = vmatpush1.msra.mxu0 %v407
          %460 = vmatprep.subr.mxu0 0.0
          %461 = vmatpush1.msra.mxu0 %v406
          %462 = vmatprep.subr.mxu0 0.0
          %463 = vmatpush2.msra.mxu0 0.0
          %464 = vmatprep.subr.mxu0 0.0
          %465 = vmatpush2.msra.mxu0 0.0
          %466 = vmatprep.subr.mxu0 0.0
          %467 = vmatpush2.msra.mxu0 0.0
          %468 = vmatprep.subr.mxu0 0.0
          %469 = vmatpush2.msra.mxu0 0.0
          %470 = vmatprep.subr.mxu0 0.0
          %471 = vmatpush2.msra.mxu0 0.0
          %472 = vmatprep.subr.mxu0 0.0
          %473 = vmatpush2.msra.mxu0 0.0
          %474 = vmatprep.subr.mxu0 0.0
          %475 = vmatpush2.msra.mxu0 0.0
          %476 = vmatprep.subr.mxu0 0.0
          %477 = vmatpush2.msra.mxu0 0.0
          %478 = vmatprep.subr.mxu0 0.0
          %479 = vmatpush2.msra.mxu0 0.0
          %480 = vmatprep.subr.mxu0 0.0
          %481 = vmatpush2.msra.mxu0 0.0
          %482 = vmatprep.subr.mxu0 0.0
          %483 = vmatpush2.msra.mxu0 0.0
          %484 = vmatprep.subr.mxu0 0.0
          %485 = vmatpush2.msra.mxu0 0.0
          %486 = vmatprep.subr.mxu0 0.0
          %487 = vmatpush2.msra.mxu0 0.0
          %488 = vmatprep.subr.mxu0 0.0
          %489 = vmatpush2.msra.mxu0 0.0
          %490 = vmatprep.subr.mxu0 0.0
          %491 = vmatpush2.msra.mxu0 0.0
          %492 = vmatprep.subr.mxu0 0.0
          %493 = vmatpush2.msra.mxu0 0.0
          %494 = vmatprep.mubr.f32.mxu0 0.0
          %495 = vmatmul.mubr.f32.gmra.mxu0 %v419
          %v496 = vpop.f32.mrf.mxu0
          %v497 = vadd.f32 0.0, %v496
          %v498 = vpop.f32.mrf.mxu0
          %499 = vmatprep.mubr.f32.mxu0 0.0
          %500 = vmatmul.mubr.f32.gmra.mxu0 %v422
          %v501 = vpop.f32.mrf.mxu0
          %v502 = vadd.f32 0.0, %v501
          %v503 = vpop.f32.mrf.mxu0
          %504 = vmatprep.mubr.f32.mxu0 0.0
          %505 = vmatmul.mubr.f32.gmra.mxu0 %v425
          %v506 = vpop.f32.mrf.mxu0
          %v507 = vadd.f32 0.0, %v506
          %v508 = vpop.f32.mrf.mxu0
          %509 = vmatprep.mubr.f32.mxu0 0.0
          %510 = vmatmul.mubr.f32.gmra.mxu0 %v428
          %v511 = vpop.f32.mrf.mxu0
          %v512 = vadd.f32 0.0, %v511
          %v513 = vpop.f32.mrf.mxu0
          %514 = vdwg.mxu0
          %v516 = vsel %vm378, %v497, 0
          %v519 = vsel %vm378, %v502, 0
          %v522 = vsel %vm378, %v507, 0
          %v525 = vsel %vm378, %v512, 0
          %527 = vmatprep.subr.mxu0 0.0
          %528 = vmatpush1.msra.mxu0 0.0
          %529 = vmatprep.subr.mxu0 0.0
          %530 = vmatpush1.msra.mxu0 0.0
          %531 = vmatprep.subr.mxu0 0.0
          %532 = vmatpush1.msra.mxu0 0.0
          %533 = vmatprep.subr.mxu0 0.0
          %534 = vmatpush1.msra.mxu0 0.0
          %535 = vmatprep.subr.mxu0 0.0
          %536 = vmatpush1.msra.mxu0 0.0
          %537 = vmatprep.subr.mxu0 0.0
          %538 = vmatpush1.msra.mxu0 0.0
          %539 = vmatprep.subr.mxu0 0.0
          %540 = vmatpush1.msra.mxu0 0.0
          %541 = vmatprep.subr.mxu0 0.0
          %542 = vmatpush1.msra.mxu0 0.0
          %543 = vmatprep.subr.mxu0 0.0
          %544 = vmatpush1.msra.mxu0 0.0
          %545 = vmatprep.subr.mxu0 0.0
          %546 = vmatpush1.msra.mxu0 0.0
          %547 = vmatprep.subr.mxu0 0.0
          %548 = vmatpush1.msra.mxu0 0.0
          %549 = vmatprep.subr.mxu0 0.0
          %550 = vmatpush1.msra.mxu0 0.0
          %551 = vmatprep.subr.mxu0 0.0
          %552 = vmatpush1.msra.mxu0 0.0
          %553 = vmatprep.subr.mxu0 0.0
          %554 = vmatpush1.msra.mxu0 0.0
          %555 = vmatprep.subr.mxu0 0.0
          %556 = vmatpush1.msra.mxu0 %v363
          %557 = vmatprep.subr.mxu0 0.0
          %558 = vmatpush1.msra.mxu0 %v362
          %559 = vmatprep.subr.mxu0 0.0
          %560 = vmatpush2.msra.mxu0 0.0
          %561 = vmatprep.subr.mxu0 0.0
          %562 = vmatpush2.msra.mxu0 0.0
          %563 = vmatprep.subr.mxu0 0.0
          %564 = vmatpush2.msra.mxu0 0.0
          %565 = vmatprep.subr.mxu0 0.0
          %566 = vmatpush2.msra.mxu0 0.0
          %567 = vmatprep.subr.mxu0 0.0
          %568 = vmatpush2.msra.mxu0 0.0
          %569 = vmatprep.subr.mxu0 0.0
          %570 = vmatpush2.msra.mxu0 0.0
          %571 = vmatprep.subr.mxu0 0.0
          %572 = vmatpush2.msra.mxu0 0.0
          %573 = vmatprep.subr.mxu0 0.0
          %574 = vmatpush2.msra.mxu0 0.0
          %575 = vmatprep.subr.mxu0 0.0
          %576 = vmatpush2.msra.mxu0 0.0
          %577 = vmatprep.subr.mxu0 0.0
          %578 = vmatpush2.msra.mxu0 0.0
          %579 = vmatprep.subr.mxu0 0.0
          %580 = vmatpush2.msra.mxu0 0.0
          %581 = vmatprep.subr.mxu0 0.0
          %582 = vmatpush2.msra.mxu0 0.0
          %583 = vmatprep.subr.mxu0 0.0
          %584 = vmatpush2.msra.mxu0 0.0
          %585 = vmatprep.subr.mxu0 0.0
          %586 = vmatpush2.msra.mxu0 0.0
          %587 = vmatprep.subr.mxu0 0.0
          %588 = vmatpush2.msra.mxu0 0.0
          %589 = vmatprep.subr.mxu0 0.0
          %590 = vmatpush2.msra.mxu0 0.0
          %591 = vmatprep.mubr.f32.mxu0 0.0
          %592 = vmatmul.mubr.f32.gmra.mxu0 %v516
          %v593 = vpop.f32.mrf.mxu0
          %v594 = vadd.f32 0.0, %v593
          %v595 = vpop.f32.mrf.mxu0
          %596 = vmatprep.mubr.f32.mxu0 0.0
          %597 = vmatmul.mubr.f32.gmra.mxu0 %v519
          %v598 = vpop.f32.mrf.mxu0
          %v599 = vadd.f32 0.0, %v598
          %v600 = vpop.f32.mrf.mxu0
          %601 = vmatprep.mubr.f32.mxu0 0.0
          %602 = vmatmul.mubr.f32.gmra.mxu0 %v522
          %v603 = vpop.f32.mrf.mxu0
          %v604 = vadd.f32 0.0, %v603
          %v605 = vpop.f32.mrf.mxu0
          %606 = vmatprep.mubr.f32.mxu0 0.0
          %607 = vmatmul.mubr.f32.gmra.mxu0 %v525
          %v608 = vpop.f32.mrf.mxu0
          %v609 = vadd.f32 0.0, %v608
          %v610 = vpop.f32.mrf.mxu0
          %611 = vdwg.mxu0
          %612 = vmatprep.subr.mxu0 0.0
          %613 = vmatpush1.msra.mxu0 0.0
          %614 = vmatprep.subr.mxu0 0.0
          %615 = vmatpush1.msra.mxu0 0.0
          %616 = vmatprep.subr.mxu0 0.0
          %617 = vmatpush1.msra.mxu0 0.0
          %618 = vmatprep.subr.mxu0 0.0
          %619 = vmatpush1.msra.mxu0 0.0
          %620 = vmatprep.subr.mxu0 0.0
          %621 = vmatpush1.msra.mxu0 0.0
          %622 = vmatprep.subr.mxu0 0.0
          %623 = vmatpush1.msra.mxu0 0.0
          %624 = vmatprep.subr.mxu0 0.0
          %625 = vmatpush1.msra.mxu0 0.0
          %626 = vmatprep.subr.mxu0 0.0
          %627 = vmatpush1.msra.mxu0 0.0
          %628 = vmatprep.subr.mxu0 0.0
          %629 = vmatpush1.msra.mxu0 0.0
          %630 = vmatprep.subr.mxu0 0.0
          %631 = vmatpush1.msra.mxu0 0.0
          %632 = vmatprep.subr.mxu0 0.0
          %633 = vmatpush1.msra.mxu0 0.0
          %634 = vmatprep.subr.mxu0 0.0
          %635 = vmatpush1.msra.mxu0 0.0
          %636 = vmatprep.subr.mxu0 0.0
          %637 = vmatpush1.msra.mxu0 0.0
          %638 = vmatprep.subr.mxu0 0.0
          %639 = vmatpush1.msra.mxu0 0.0
          %640 = vmatprep.subr.mxu0 0.0
          %641 = vmatpush1.msra.mxu0 %v365
          %642 = vmatprep.subr.mxu0 0.0
          %643 = vmatpush1.msra.mxu0 %v364
          %644 = vmatprep.subr.mxu0 0.0
          %645 = vmatpush2.msra.mxu0 0.0
          %646 = vmatprep.subr.mxu0 0.0
          %647 = vmatpush2.msra.mxu0 0.0
          %648 = vmatprep.subr.mxu0 0.0
          %649 = vmatpush2.msra.mxu0 0.0
          %650 = vmatprep.subr.mxu0 0.0
          %651 = vmatpush2.msra.mxu0 0.0
          %652 = vmatprep.subr.mxu0 0.0
          %653 = vmatpush2.msra.mxu0 0.0
          %654 = vmatprep.subr.mxu0 0.0
          %655 = vmatpush2.msra.mxu0 0.0
          %656 = vmatprep.subr.mxu0 0.0
          %657 = vmatpush2.msra.mxu0 0.0
          %658 = vmatprep.subr.mxu0 0.0
          %659 = vmatpush2.msra.mxu0 0.0
          %660 = vmatprep.subr.mxu0 0.0
          %661 = vmatpush2.msra.mxu0 0.0
          %662 = vmatprep.subr.mxu0 0.0
          %663 = vmatpush2.msra.mxu0 0.0
          %664 = vmatprep.subr.mxu0 0.0
          %665 = vmatpush2.msra.mxu0 0.0
          %666 = vmatprep.subr.mxu0 0.0
          %667 = vmatpush2.msra.mxu0 0.0
          %668 = vmatprep.subr.mxu0 0.0
          %669 = vmatpush2.msra.mxu0 0.0
          %670 = vmatprep.subr.mxu0 0.0
          %671 = vmatpush2.msra.mxu0 0.0
          %672 = vmatprep.subr.mxu0 0.0
          %673 = vmatpush2.msra.mxu0 0.0
          %674 = vmatprep.subr.mxu0 0.0
          %675 = vmatpush2.msra.mxu0 0.0
          %676 = vmatprep.mubr.f32.mxu0 0.0
          %677 = vmatmul.mubr.f32.gmra.mxu0 %v516
          %v678 = vpop.f32.mrf.mxu0
          %v679 = vadd.f32 0.0, %v678
          %v680 = vpop.f32.mrf.mxu0
          %681 = vmatprep.mubr.f32.mxu0 0.0
          %682 = vmatmul.mubr.f32.gmra.mxu0 %v519
          %v683 = vpop.f32.mrf.mxu0
          %v684 = vadd.f32 0.0, %v683
          %v685 = vpop.f32.mrf.mxu0
          %686 = vmatprep.mubr.f32.mxu0 0.0
          %687 = vmatmul.mubr.f32.gmra.mxu0 %v522
          %v688 = vpop.f32.mrf.mxu0
          %v689 = vadd.f32 0.0, %v688
          %v690 = vpop.f32.mrf.mxu0
          %691 = vmatprep.mubr.f32.mxu0 0.0
          %692 = vmatmul.mubr.f32.gmra.mxu0 %v525
          %v693 = vpop.f32.mrf.mxu0
          %v694 = vadd.f32 0.0, %v693
          %v695 = vpop.f32.mrf.mxu0
          %696 = vdwg.mxu0
          %v697 = vsub.f32 %v594, %v689
          %v698 = vsub.f32 %v599, %v694
          %v699 = vadd.f32 %v679, %v604
          %v700 = vadd.f32 %v684, %v609
          %v701 = vmul.f32 %v697, %v350
          %v702 = vmul.f32 %v698, %v351
          %v703 = vmul.f32 %v699, %v352
          %v704 = vmul.f32 %v700, %v353
          %v706 = vsel %vm417, %v358, 0
          %v709 = vsel %vm417, %v359, 0
          %v712 = vsel %vm417, %v360, 0
          %v715 = vsel %vm417, %v361, 0
          %717 = vmatprep.subr.mxu0 0.0
          %718 = vmatpush1.msra.mxu0 0.0
          %719 = vmatprep.subr.mxu0 0.0
          %720 = vmatpush1.msra.mxu0 0.0
          %721 = vmatprep.subr.mxu0 0.0
          %722 = vmatpush1.msra.mxu0 0.0
          %723 = vmatprep.subr.mxu0 0.0
          %724 = vmatpush1.msra.mxu0 0.0
          %725 = vmatprep.subr.mxu0 0.0
          %726 = vmatpush1.msra.mxu0 0.0
          %727 = vmatprep.subr.mxu0 0.0
          %728 = vmatpush1.msra.mxu0 0.0
          %729 = vmatprep.subr.mxu0 0.0
          %730 = vmatpush1.msra.mxu0 0.0
          %731 = vmatprep.subr.mxu0 0.0
          %732 = vmatpush1.msra.mxu0 0.0
          %733 = vmatprep.subr.mxu0 0.0
          %734 = vmatpush1.msra.mxu0 0.0
          %735 = vmatprep.subr.mxu0 0.0
          %736 = vmatpush1.msra.mxu0 0.0
          %737 = vmatprep.subr.mxu0 0.0
          %738 = vmatpush1.msra.mxu0 0.0
          %739 = vmatprep.subr.mxu0 0.0
          %740 = vmatpush1.msra.mxu0 0.0
          %741 = vmatprep.subr.mxu0 0.0
          %742 = vmatpush1.msra.mxu0 %v704
          %743 = vmatprep.subr.mxu0 0.0
          %744 = vmatpush1.msra.mxu0 %v703
          %745 = vmatprep.subr.mxu0 0.0
          %746 = vmatpush1.msra.mxu0 %v702
          %747 = vmatprep.subr.mxu0 0.0
          %748 = vmatpush1.msra.mxu0 %v701
          %749 = vmatprep.subr.mxu0 0.0
          %750 = vmatpush2.msra.mxu0 0.0
          %751 = vmatprep.subr.mxu0 0.0
          %752 = vmatpush2.msra.mxu0 0.0
          %753 = vmatprep.subr.mxu0 0.0
          %754 = vmatpush2.msra.mxu0 0.0
          %755 = vmatprep.subr.mxu0 0.0
          %756 = vmatpush2.msra.mxu0 0.0
          %757 = vmatprep.subr.mxu0 0.0
          %758 = vmatpush2.msra.mxu0 0.0
          %759 = vmatprep.subr.mxu0 0.0
          %760 = vmatpush2.msra.mxu0 0.0
          %761 = vmatprep.subr.mxu0 0.0
          %762 = vmatpush2.msra.mxu0 0.0
          %763 = vmatprep.subr.mxu0 0.0
          %764 = vmatpush2.msra.mxu0 0.0
          %765 = vmatprep.subr.mxu0 0.0
          %766 = vmatpush2.msra.mxu0 0.0
          %767 = vmatprep.subr.mxu0 0.0
          %768 = vmatpush2.msra.mxu0 0.0
          %769 = vmatprep.subr.mxu0 0.0
          %770 = vmatpush2.msra.mxu0 0.0
          %771 = vmatprep.subr.mxu0 0.0
          %772 = vmatpush2.msra.mxu0 0.0
          %773 = vmatprep.subr.mxu0 0.0
          %774 = vmatpush2.msra.mxu0 0.0
          %775 = vmatprep.subr.mxu0 0.0
          %776 = vmatpush2.msra.mxu0 0.0
          %777 = vmatprep.subr.mxu0 0.0
          %778 = vmatpush2.msra.mxu0 0.0
          %779 = vmatprep.subr.mxu0 0.0
          %780 = vmatpush2.msra.mxu0 0.0
          %781 = vmatprep.mubr.f32.mxu0 0.0
          %782 = vmatmul.mubr.f32.gmra.mxu0 %v706
          %v783 = vpop.f32.mrf.mxu0
          %v784 = vadd.f32 0.0, %v783
          %v785 = vpop.f32.mrf.mxu0
          %786 = vmatprep.mubr.f32.mxu0 0.0
          %787 = vmatmul.mubr.f32.gmra.mxu0 %v709
          %v788 = vpop.f32.mrf.mxu0
          %v789 = vadd.f32 0.0, %v788
          %v790 = vpop.f32.mrf.mxu0
          %791 = vmatprep.mubr.f32.mxu0 0.0
          %792 = vmatmul.mubr.f32.gmra.mxu0 %v712
          %v793 = vpop.f32.mrf.mxu0
          %v794 = vadd.f32 0.0, %v793
          %v795 = vpop.f32.mrf.mxu0
          %796 = vmatprep.mubr.f32.mxu0 0.0
          %797 = vmatmul.mubr.f32.gmra.mxu0 %v715
          %v798 = vpop.f32.mrf.mxu0
          %v799 = vadd.f32 0.0, %v798
          %v800 = vpop.f32.mrf.mxu0
          %801 = vdwg.mxu0
          %v803 = vsel %vm378, %v784, 0
          %v806 = vsel %vm378, %v789, 0
          %v809 = vsel %vm378, %v794, 0
          %v812 = vsel %vm378, %v799, 0
          %814 = vmatprep.subr.mxu0 0.0
          %815 = vmatpush1.msra.mxu0 0.0
          %816 = vmatprep.subr.mxu0 0.0
          %817 = vmatpush1.msra.mxu0 0.0
          %818 = vmatprep.subr.mxu0 0.0
          %819 = vmatpush1.msra.mxu0 0.0
          %820 = vmatprep.subr.mxu0 0.0
          %821 = vmatpush1.msra.mxu0 0.0
          %822 = vmatprep.subr.mxu0 0.0
          %823 = vmatpush1.msra.mxu0 0.0
          %824 = vmatprep.subr.mxu0 0.0
          %825 = vmatpush1.msra.mxu0 0.0
          %826 = vmatprep.subr.mxu0 0.0
          %827 = vmatpush1.msra.mxu0 0.0
          %828 = vmatprep.subr.mxu0 0.0
          %829 = vmatpush1.msra.mxu0 0.0
          %830 = vmatprep.subr.mxu0 0.0
          %831 = vmatpush1.msra.mxu0 0.0
          %832 = vmatprep.subr.mxu0 0.0
          %833 = vmatpush1.msra.mxu0 0.0
          %834 = vmatprep.subr.mxu0 0.0
          %835 = vmatpush1.msra.mxu0 0.0
          %836 = vmatprep.subr.mxu0 0.0
          %837 = vmatpush1.msra.mxu0 0.0
          %838 = vmatprep.subr.mxu0 0.0
          %839 = vmatpush1.msra.mxu0 0.0
          %840 = vmatprep.subr.mxu0 0.0
          %841 = vmatpush1.msra.mxu0 0.0
          %842 = vmatprep.subr.mxu0 0.0
          %843 = vmatpush1.msra.mxu0 %v367
          %844 = vmatprep.subr.mxu0 0.0
          %845 = vmatpush1.msra.mxu0 %v366
          %846 = vmatprep.subr.mxu0 0.0
          %847 = vmatpush2.msra.mxu0 0.0
          %848 = vmatprep.subr.mxu0 0.0
          %849 = vmatpush2.msra.mxu0 0.0
          %850 = vmatprep.subr.mxu0 0.0
          %851 = vmatpush2.msra.mxu0 0.0
          %852 = vmatprep.subr.mxu0 0.0
          %853 = vmatpush2.msra.mxu0 0.0
          %854 = vmatprep.subr.mxu0 0.0
          %855 = vmatpush2.msra.mxu0 0.0
          %856 = vmatprep.subr.mxu0 0.0
          %857 = vmatpush2.msra.mxu0 0.0
          %858 = vmatprep.subr.mxu0 0.0
          %859 = vmatpush2.msra.mxu0 0.0
          %860 = vmatprep.subr.mxu0 0.0
          %861 = vmatpush2.msra.mxu0 0.0
          %862 = vmatprep.subr.mxu0 0.0
          %863 = vmatpush2.msra.mxu0 0.0
          %864 = vmatprep.subr.mxu0 0.0
          %865 = vmatpush2.msra.mxu0 0.0
          %866 = vmatprep.subr.mxu0 0.0
          %867 = vmatpush2.msra.mxu0 0.0
          %868 = vmatprep.subr.mxu0 0.0
          %869 = vmatpush2.msra.mxu0 0.0
          %870 = vmatprep.subr.mxu0 0.0
          %871 = vmatpush2.msra.mxu0 0.0
          %872 = vmatprep.subr.mxu0 0.0
          %873 = vmatpush2.msra.mxu0 0.0
          %874 = vmatprep.subr.mxu0 0.0
          %875 = vmatpush2.msra.mxu0 0.0
          %876 = vmatprep.subr.mxu0 0.0
          %877 = vmatpush2.msra.mxu0 0.0
          %878 = vmatprep.mubr.f32.mxu0 0.0
          %879 = vmatmul.mubr.f32.gmra.mxu0 %v803
          %v880 = vpop.f32.mrf.mxu0
          %v881 = vadd.f32 0.0, %v880
          %v882 = vpop.f32.mrf.mxu0
          %883 = vmatprep.mubr.f32.mxu0 0.0
          %884 = vmatmul.mubr.f32.gmra.mxu0 %v806
          %v885 = vpop.f32.mrf.mxu0
          %v886 = vadd.f32 0.0, %v885
          %v887 = vpop.f32.mrf.mxu0
          %888 = vmatprep.mubr.f32.mxu0 0.0
          %889 = vmatmul.mubr.f32.gmra.mxu0 %v809
          %v890 = vpop.f32.mrf.mxu0
          %v891 = vadd.f32 0.0, %v890
          %v892 = vpop.f32.mrf.mxu0
          %893 = vmatprep.mubr.f32.mxu0 0.0
          %894 = vmatmul.mubr.f32.gmra.mxu0 %v812
          %v895 = vpop.f32.mrf.mxu0
          %v896 = vadd.f32 0.0, %v895
          %v897 = vpop.f32.mrf.mxu0
          %898 = vdwg.mxu0
          %899 = vmatprep.subr.mxu0 0.0
          %900 = vmatpush1.msra.mxu0 0.0
          %901 = vmatprep.subr.mxu0 0.0
          %902 = vmatpush1.msra.mxu0 0.0
          %903 = vmatprep.subr.mxu0 0.0
          %904 = vmatpush1.msra.mxu0 0.0
          %905 = vmatprep.subr.mxu0 0.0
          %906 = vmatpush1.msra.mxu0 0.0
          %907 = vmatprep.subr.mxu0 0.0
          %908 = vmatpush1.msra.mxu0 0.0
          %909 = vmatprep.subr.mxu0 0.0
          %910 = vmatpush1.msra.mxu0 0.0
          %911 = vmatprep.subr.mxu0 0.0
          %912 = vmatpush1.msra.mxu0 0.0
          %913 = vmatprep.subr.mxu0 0.0
          %914 = vmatpush1.msra.mxu0 0.0
          %915 = vmatprep.subr.mxu0 0.0
          %916 = vmatpush1.msra.mxu0 0.0
          %917 = vmatprep.subr.mxu0 0.0
          %918 = vmatpush1.msra.mxu0 0.0
          %919 = vmatprep.subr.mxu0 0.0
          %920 = vmatpush1.msra.mxu0 0.0
          %921 = vmatprep.subr.mxu0 0.0
          %922 = vmatpush1.msra.mxu0 0.0
          %923 = vmatprep.subr.mxu0 0.0
          %924 = vmatpush1.msra.mxu0 0.0
          %925 = vmatprep.subr.mxu0 0.0
          %926 = vmatpush1.msra.mxu0 0.0
          %927 = vmatprep.subr.mxu0 0.0
          %928 = vmatpush1.msra.mxu0 %v369
          %929 = vmatprep.subr.mxu0 0.0
          %930 = vmatpush1.msra.mxu0 %v368
          %931 = vmatprep.subr.mxu0 0.0
          %932 = vmatpush2.msra.mxu0 0.0
          %933 = vmatprep.subr.mxu0 0.0
          %934 = vmatpush2.msra.mxu0 0.0
          %935 = vmatprep.subr.mxu0 0.0
          %936 = vmatpush2.msra.mxu0 0.0
          %937 = vmatprep.subr.mxu0 0.0
          %938 = vmatpush2.msra.mxu0 0.0
          %939 = vmatprep.subr.mxu0 0.0
          %940 = vmatpush2.msra.mxu0 0.0
          %941 = vmatprep.subr.mxu0 0.0
          %942 = vmatpush2.msra.mxu0 0.0
          %943 = vmatprep.subr.mxu0 0.0
          %944 = vmatpush2.msra.mxu0 0.0
          %945 = vmatprep.subr.mxu0 0.0
          %946 = vmatpush2.msra.mxu0 0.0
          %947 = vmatprep.subr.mxu0 0.0
          %948 = vmatpush2.msra.mxu0 0.0
          %949 = vmatprep.subr.mxu0 0.0
          %950 = vmatpush2.msra.mxu0 0.0
          %951 = vmatprep.subr.mxu0 0.0
          %952 = vmatpush2.msra.mxu0 0.0
          %953 = vmatprep.subr.mxu0 0.0
          %954 = vmatpush2.msra.mxu0 0.0
          %955 = vmatprep.subr.mxu0 0.0
          %956 = vmatpush2.msra.mxu0 0.0
          %957 = vmatprep.subr.mxu0 0.0
          %958 = vmatpush2.msra.mxu0 0.0
          %959 = vmatprep.subr.mxu0 0.0
          %960 = vmatpush2.msra.mxu0 0.0
          %961 = vmatprep.subr.mxu0 0.0
          %962 = vmatpush2.msra.mxu0 0.0
          %963 = vmatprep.mubr.f32.mxu0 0.0
          %964 = vmatmul.mubr.f32.gmra.mxu0 %v803
          %v965 = vpop.f32.mrf.mxu0
          %v966 = vadd.f32 0.0, %v965
          %v967 = vpop.f32.mrf.mxu0
          %968 = vmatprep.mubr.f32.mxu0 0.0
          %969 = vmatmul.mubr.f32.gmra.mxu0 %v806
          %v970 = vpop.f32.mrf.mxu0
          %v971 = vadd.f32 0.0, %v970
          %v972 = vpop.f32.mrf.mxu0
          %973 = vmatprep.mubr.f32.mxu0 0.0
          %974 = vmatmul.mubr.f32.gmra.mxu0 %v809
          %v975 = vpop.f32.mrf.mxu0
          %v976 = vadd.f32 0.0, %v975
          %v977 = vpop.f32.mrf.mxu0
          %978 = vmatprep.mubr.f32.mxu0 0.0
          %979 = vmatmul.mubr.f32.gmra.mxu0 %v812
          %v980 = vpop.f32.mrf.mxu0
          %v981 = vadd.f32 0.0, %v980
          %v982 = vpop.f32.mrf.mxu0
          %983 = vdwg.mxu0
          %v984 = vsub.f32 %v881, %v976
          %v985 = vsub.f32 %v886, %v981
          %v986 = vadd.f32 %v966, %v891
          %v987 = vadd.f32 %v971, %v896
          %v988 = vstv %s349
          %v989 = vmul.f32 %v988, %v406
          %v990 = vmul.f32 %v988, %v407
          %v991 = vmul.f32 %v988, %v408
          %v992 = vmul.f32 %v988, %v409
          %v993 = vadd.f32 %v984, %v989
          %v994 = vadd.f32 %v985, %v990
          %v995 = vadd.f32 %v986, %v991
          %v996 = vadd.f32 %v987, %v992
          %v997 = vmul.f32 %v406, %v993
          %v998 = vmul.f32 %v407, %v994
          %v999 = vmul.f32 %v408, %v995
          %v1000 = vmul.f32 %v409, %v996
          %v1001 = vsel %vm378, %v997, 0.0
          %v1002 = vsel %vm378, %v998, 0.0
          %v1003 = vadd.f32 %v1001, %v1002
          %v1004 = vsel %vm378, %v999, 0.0
          %v1005 = vadd.f32 %v1003, %v1004
          %v1006 = vsel %vm378, %v1000, 0.0
          %v1007 = vadd.f32 %v1005, %v1006
          %1008 = vadd.xlane.f32.xlu0 %v1007
          %v1009 = vpop.xlane.xlu0 %1008
          %v1010 = vrot.slane %v1009, 4
          %v1011 = vadd.f32 %v1009, %v1010
          %v1012 = vrot.slane %v1011, 2
          %v1013 = vadd.f32 %v1011, %v1012
          %v1014 = vrot.slane %v1013, 1
          %v1015 = vadd.f32 %v1013, %v1014
          %s1016 = vtos %v1015
          %v1017 = vstv %s1016
          %v1018 = vrcp.pop %v1017
          %s1019 = vtos %v1018
          %s1020 = smul.f32 %s410, %s1019
          %v1021 = vstv %s1020
          %v1022 = vmul.f32 %v1021, %v406
          %v1023 = vmul.f32 %v1021, %v407
          %v1024 = vmul.f32 %v1021, %v408
          %v1025 = vmul.f32 %v1021, %v409
          %v1026 = vadd.f32 %v398, %v1022
          %v1027 = vadd.f32 %v399, %v1023
          %v1028 = vadd.f32 %v400, %v1024
          %v1029 = vadd.f32 %v401, %v1025
          %v1030 = vmul.f32 %v1021, %v993
          %v1031 = vmul.f32 %v1021, %v994
          %v1032 = vmul.f32 %v1021, %v995
          %v1033 = vmul.f32 %v1021, %v996
          %v1034 = vsub.f32 %v402, %v1030
          %v1035 = vsub.f32 %v403, %v1031
          %v1036 = vsub.f32 %v404, %v1032
          %v1037 = vsub.f32 %v405, %v1033
          %v1038 = vmul.f32 %v1034, %v1034
          %v1039 = vmul.f32 %v1035, %v1035
          %v1040 = vmul.f32 %v1036, %v1036
          %v1041 = vmul.f32 %v1037, %v1037
          %v1042 = vsel %vm378, %v1038, 0.0
          %v1043 = vsel %vm378, %v1039, 0.0
          %v1044 = vadd.f32 %v1042, %v1043
          %v1045 = vsel %vm378, %v1040, 0.0
          %v1046 = vadd.f32 %v1044, %v1045
          %v1047 = vsel %vm378, %v1041, 0.0
          %v1048 = vadd.f32 %v1046, %v1047
          %1049 = vadd.xlane.f32.xlu0 %v1048
          %v1050 = vpop.xlane.xlu0 %1049
          %v1051 = vrot.slane %v1050, 4
          %v1052 = vadd.f32 %v1050, %v1051
          %v1053 = vrot.slane %v1052, 2
          %v1054 = vadd.f32 %v1052, %v1053
          %v1055 = vrot.slane %v1054, 1
          %v1056 = vadd.f32 %v1054, %v1055
          %s1057 = vtos %v1056
          %v1058 = vstv %s410
          %v1059 = vrcp.pop %v1058
          %s1060 = vtos %v1059
          %s1061 = smul.f32 %s1057, %s1060
          %v1062 = vstv %s1061
          %v1063 = vmul.f32 %v1062, %v406
          %v1064 = vmul.f32 %v1062, %v407
          %v1065 = vmul.f32 %v1062, %v408
          %v1066 = vmul.f32 %v1062, %v409
          %v1067 = vadd.f32 %v1034, %v1063
          %v1068 = vadd.f32 %v1035, %v1064
          %v1069 = vadd.f32 %v1036, %v1065
          %v1070 = vadd.f32 %v1037, %v1066
          %p1071 = scmp.lt.f32.partialorder %s1057, 1e-10
          %s1072 = scalar_select %p1071, 1, 0
          %s1073 = sadd.s32 %s396, 1
        $region65: #{tpu_custom_call.1} parent=55 // loop_footer
          _
        $region66: #{tpu_custom_call.1} parent=55 // loop_footer_branch
          %395 = sbr.rel target = $region62
        $region67: #{tpu_custom_call.1} parent=55 // loop_exit
          _
        %1074 = vst.msk [vmem:[%s348] sm:$0xff] %vm378, %v398
        %1075 = vst.msk [vmem:[%s348 + $0x8] sm:$0xff] %vm378, %v399
        %1076 = vst.msk [vmem:[%s348 + $0x10] sm:$0xff] %vm378, %v400
        %1077 = vst.msk [vmem:[%s348 + $0x18] sm:$0xff] %vm378, %v401
        %p1078 = scmp.lt.s32.totalorder %s22, 1
        %s1079 = scalar_select %p1078, %s22, 1
        %s1080 = smul.addr %s1079, 4
        %s1081 = smul.addr %s1080, 8
        %s1082 = scalar_lea.vmem %s9, %s1081
        // Predicated region
        $region68: #{tpu_custom_call.1} parent=55 // pred_check
          %p1083 = pneg %p234
        $region69: #{tpu_custom_call.1} parent=55 // pred_check_branch
          %1085 = sbr.rel (%p1083) target = $region71
        $region70: #{tpu_custom_call.1} parent=55 // pred_region
          _
        $region71: #{tpu_custom_call.1} parent=55 // pred_fallthru
          _
      $region56: #{tpu_custom_call.1} parent=5 // pred_fallthru
        _
      %p1086 = scmp.le.s32.totalorder 2, %s17
      // Predicated region
      $region72: #{tpu_custom_call.1} parent=5 // pred_check
        %p1087 = pneg %p1086
      $region73: #{tpu_custom_call.1} parent=5 // pred_check_branch
        %1089 = sbr.rel (%p1087) target = $region75
      $region74: #{tpu_custom_call.1} parent=5 // pred_region
        %s1090 = ssub.s32 %s17, 2
        // Predicated region
        $region76: #{tpu_custom_call.1} parent=74 // pred_check
          %p1091 = pneg %p240
        $region77: #{tpu_custom_call.1} parent=74 // pred_check_branch
          %1093 = sbr.rel (%p1091) target = $region79
        $region78: #{tpu_custom_call.1} parent=74 // pred_region
          %p1094 = scmp.lt.s32.totalorder %s23, 1
          %s1095 = scalar_select %p1094, %s23, 1
          %s1096 = smul.addr %s1095, 4
          %s1097 = smul.addr %s1096, 8
          %s1098 = scalar_lea.vmem %s9, %s1097
        $region79: #{tpu_custom_call.1} parent=74 // pred_fallthru
          _
      $region75: #{tpu_custom_call.1} parent=5 // pred_fallthru
        _
    $region6: #{tpu_custom_call.1} parent=1 // loop_footer
      %s21 = sadd.s32 1, %s17
    $region7: #{tpu_custom_call.1} parent=1 // loop_footer_branch
      %16 = sbr.rel target = $region3
    $region8: #{tpu_custom_call.1} parent=1 // loop_exit
      _
    %1099 = vsyncpa [#allocation4], 1
    %s1100 = scalar_lea.sflag [#allocation4], 1
    %1101 = vsyncpa %s1100, 1

</llo_original>
